<compile_context>
chip_gen: v5e
topology: v5e:2x2
jax: 0.10.0
libtpu: 0.0.40
codegen_flags: <defaults>
</compile_context>

<pallas_src>
import math
import functools

import jax
import jax.numpy as jnp
from jax.experimental import pallas as pl
from jax.experimental.pallas import tpu as pltpu

# ---------------- configuration (small, consistent with the module) ----------------
BATCH = 2
SEQ = 8
DIM = 32        # d_model
N_HEAD = 2
OUT_DIM = 4
D_K = DIM // N_HEAD

_HIGHEST = jax.lax.Precision.HIGHEST


# ---------------- Pallas kernel: one invocation for the whole batch ----------------
def attention_pool_kernel(x_ref,      # (B*S, D)  flattened activations, VMEM
                          slab_ref,   # (16, D)   packed constants, VMEM
                          out_ref,    # (B, OUT_DIM)
                          *, batch, seq, n_head, out_dim):
    nq = n_head * out_dim
    # Packed-constant slab layout (all static ref slices -> zero runtime cost):
    #   rows [0, H*od)        : qk_all  -- row h*od+i = (Q_h Wk_h)[i,:] / sqrt(dk)
    #   rows [H*od, H*od+H)   : wvolT   -- row h      = (Wv_h^T Wo_h^T wl^T)^T
    #   row  H*od+H           : scalar constant C broadcast over lanes
    qk_all = slab_ref[0:nq, :]                                     # (H*od, D)
    wvolT = slab_ref[nq:nq + n_head, :]                            # (H, D)
    c_row = slab_ref[nq + n_head:nq + n_head + 1, 0:out_dim]       # (1, od)

    rows = []
    for b in range(batch):                      # static unroll (B=2): independent chains
        x_b = x_ref[b * seq:(b + 1) * seq, :]   # (S, D) sublane-aligned static slice

        # Scores for BOTH heads in one MXU push: (H*od, S); bk drops out of softmax.
        s = jax.lax.dot_general(qk_all, x_b, (((1,), (1,)), ((), ())),
                                preferred_element_type=jnp.float32)
        # Row-wise softmax over seq (each row is one (head, pooled-query) pair).
        s = s - jnp.max(s, axis=-1, keepdims=True)
        p = jnp.exp(s)
        p = p / jnp.sum(p, axis=-1, keepdims=True)   # exact divide (approx rcp broke check)

        # Folded value -> output-proj -> final-linear path, both heads at once: (H, S)
        y = jax.lax.dot_general(wvolT, x_b, (((1,), (1,)), ((), ())),
                                preferred_element_type=jnp.float32)

        acc = None
        for h in range(n_head):                 # static unroll (H=2)
            # (1, od) row contribution of head h: p_h @ y_h  (contract over seq)
            contrib = jax.lax.dot_general(
                y[h:h + 1, :], p[h * out_dim:(h + 1) * out_dim, :],
                (((1,), (1,)), ((), ())), preferred_element_type=jnp.float32)
            acc = contrib if acc is None else acc + contrib
        rows.append(acc)

    # Assemble whole result in registers; ONE store of the (B, OUT_DIM) output.
    out_ref[...] = jnp.concatenate(rows, axis=0) + c_row


# ---------------- wrapper ----------------
def attention_pool(x, params, *, n_head=N_HEAD):
    B, S, D = x.shape
    od = params["query"].shape[0]
    H = n_head
    dk = D // H
    scale = 1.0 / math.sqrt(dk)

    mm = functools.partial(jnp.matmul, precision=_HIGHEST)

    # ---- wrapper-side algebraic folding (batch-invariant, done once) ----
    # Q = query @ Wq.T + bq ; fold Wk into Q per head (the bk term is constant over
    # seq, so it cancels inside the softmax and is dropped).
    q_full = mm(params["query"], params["wq"].T) + params["bq"]                 # (od, D)
    qk_all = jnp.concatenate(
        [mm(q_full[:, h * dk:(h + 1) * dk], params["wk"][h * dk:(h + 1) * dk, :])
         for h in range(H)], axis=0) * scale                                    # (H*od, D)

    # Value path folded through Wo and the final Linear(D,1): wvol_h = Wv_h^T Wo_h^T wl^T
    wo_wl = mm(params["wo"].T, params["wl"].T)                                  # (D, 1)
    wvT = params["wv"].T
    wvolT = jnp.concatenate(
        [mm(wvT[:, h * dk:(h + 1) * dk], wo_wl[h * dk:(h + 1) * dk, :]).T
         for h in range(H)], axis=0)                                            # (H, D)

    # Scalar constant: softmax rows sum to 1 -> bv folds to a constant; + bo, + bl.
    c = (mm(params["bo"], params["wl"].T) + mm(params["bv"], wo_wl))[0, 0] \
        + params["bl"][0, 0]
    c_row = jnp.full((1, D), c, jnp.float32)

    # One packed constant slab (single DMA), padded to 8-sublane multiple.
    n_rows = H * od + H + 1
    pad = (-n_rows) % 8
    slab = jnp.concatenate(
        [qk_all, wvolT, c_row, jnp.zeros((pad, D), jnp.float32)],
        axis=0).astype(jnp.float32)                                             # (16, D)

    x_flat = x.reshape(B * S, D).astype(jnp.float32)

    kernel = functools.partial(attention_pool_kernel,
                               batch=B, seq=S, n_head=H, out_dim=od)

    flops = B * (2 * (H * od) * D * S       # stacked score matmul
                 + 2 * H * D * S            # folded value matmul
                 + H * 2 * S * od)          # per-head seq contraction
    vmem = pl.BlockSpec(memory_space=pltpu.MemorySpace.VMEM)

    out = pl.pallas_call(
        kernel,
        out_shape=jax.ShapeDtypeStruct((B, od), jnp.float32),
        in_specs=[vmem, vmem],              # exactly 2 operands: x + packed constants
        out_specs=vmem,
        cost_estimate=pl.CostEstimate(
            flops=flops,
            transcendentals=B * H * od * S,
            bytes_accessed=4 * (x_flat.size + slab.size + B * od)),
    )(x_flat, slab)
    return out


# ---------------- deterministic parameter construction ----------------
def make_params(key):
    ks = jax.random.split(key, 10)
    # query ~ U[0,1)  (torch.rand)
    query = jax.random.uniform(ks[0], (OUT_DIM, DIM), jnp.float32)
    bound = 1.0 / math.sqrt(DIM)
    wq = jax.random.uniform(ks[1], (DIM, DIM), jnp.float32, -bound, bound)
    wk = jax.random.uniform(ks[2], (DIM, DIM), jnp.float32, -bound, bound)
    wv = jax.random.uniform(ks[3], (DIM, DIM), jnp.float32, -bound, bound)
    wo = jax.random.uniform(ks[4], (DIM, DIM), jnp.float32, -bound, bound)
    bq = jax.random.uniform(ks[5], (1, DIM), jnp.float32, -bound, bound)
    bk = jax.random.uniform(ks[6], (1, DIM), jnp.float32, -bound, bound)
    bv = jax.random.uniform(ks[7], (1, DIM), jnp.float32, -bound, bound)
    bo = jax.random.uniform(ks[8], (1, DIM), jnp.float32, -bound, bound)
    # line: init_linear -> uniform(-scope, scope) with scope = sqrt(6/(1+dim)), zero bias
    scope = math.sqrt(6.0 / (1 + DIM))
    wl = jax.random.uniform(ks[9], (1, DIM), jnp.float32, -scope, scope)
    bl = jnp.zeros((1, 1), jnp.float32)
    return dict(query=query, wq=wq, bq=bq, wk=wk, bk=bk, wv=wv, bv=bv,
                wo=wo, bo=bo, wl=wl, bl=bl)


# ---------------- pure-JAX reference (unfused math) for verification ----------------
def attention_pool_ref(x, p):
    B = x.shape[0]
    q = jnp.broadcast_to(p["query"][None], (B, OUT_DIM, DIM))
    Q = jnp.einsum("boi,di->bod", q, p["wq"], precision=_HIGHEST) + p["bq"]
    K = jnp.einsum("bsi,di->bsd", x, p["wk"], precision=_HIGHEST) + p["bk"]
    V = jnp.einsum("bsi,di->bsd", x, p["wv"], precision=_HIGHEST) + p["bv"]

    def split(t):  # (B, L, D) -> (B, H, L, d_k)
        return t.reshape(t.shape[0], t.shape[1], N_HEAD, D_K).transpose(0, 2, 1, 3)

    Qh, Kh, Vh = split(Q), split(K), split(V)
    scores = jnp.einsum("bhqd,bhkd->bhqk", Qh, Kh, precision=_HIGHEST) / math.sqrt(D_K)
    probs = jax.nn.softmax(scores, axis=-1)
    ctx = jnp.einsum("bhqk,bhkd->bhqd", probs, Vh, precision=_HIGHEST)
    ctx = ctx.transpose(0, 2, 1, 3).reshape(B, OUT_DIM, DIM)
    pooled = jnp.einsum("bod,ed->boe", ctx, p["wo"], precision=_HIGHEST) + p["bo"]
    logit = jnp.einsum("bod,ld->bol", pooled, p["wl"], precision=_HIGHEST)[..., 0] \
        + p["bl"][0, 0]
    return logit


if __name__ == "__main__":
    key = jax.random.PRNGKey(0)
    kx, kp = jax.random.split(key)
    x = jax.random.normal(kx, (BATCH, SEQ, DIM), jnp.float32)
    params = make_params(kp)

    out = jax.block_until_ready(attention_pool(x, params))
    ref = attention_pool_ref(x, params)

    assert out.shape == (BATCH, OUT_DIM)
    max_err = float(jnp.max(jnp.abs(out - ref)))
    assert jnp.allclose(out, ref, atol=1e-3, rtol=1e-3), (max_err, out, ref)

    print("KERNEL_OK")
</pallas_src>

<mosaic_0001>
module attributes {stable_mosaic.version = 11 : i64} {
  func.func @attention_pool_kernel(%arg0: memref<16x32xf32, #tpu.memory_space<vmem>>, %arg1: memref<16x32xf32, #tpu.memory_space<vmem>>, %arg2: memref<2x4xf32, #tpu.memory_space<vmem>>) attributes {dimension_semantics = [], scalar_prefetch = 0 : i64, scratch_operands = 0 : i64, tpu.core_type = #tpu.core_type<tc>} {
    %c0 = arith.constant 0 : index
    %c0_0 = arith.constant 0 : index
    %0 = vector.load %arg1[%c0, %c0_0] : memref<16x32xf32, #tpu.memory_space<vmem>>, vector<8x32xf32>
    %c8 = arith.constant 8 : index
    %c0_1 = arith.constant 0 : index
    %1 = vector.load %arg1[%c8, %c0_1] : memref<16x32xf32, #tpu.memory_space<vmem>>, vector<2x32xf32>
    %c10 = arith.constant 10 : index
    %c0_2 = arith.constant 0 : index
    %2 = vector.load %arg1[%c10, %c0_2] : memref<16x32xf32, #tpu.memory_space<vmem>>, vector<1x4xf32>
    %c0_3 = arith.constant 0 : index
    %c0_4 = arith.constant 0 : index
    %3 = vector.load %arg0[%c0_3, %c0_4] : memref<16x32xf32, #tpu.memory_space<vmem>>, vector<8x32xf32>
    %cst = arith.constant dense<0.000000e+00> : vector<8x8xf32>
    %4 = tpu.matmul %0, %3, %cst {dimension_numbers = #tpu.dot_dimension_numbers<[1], [1], [0], [0], [0, 0, 1, 0], [], []>} : vector<8x32xf32>, vector<8x32xf32>, vector<8x8xf32> -> vector<8x8xf32>
    %cst_5 = arith.constant dense<0xFF800000> : vector<8xf32>
    %5 = vector.multi_reduction <maximumf>, %4, %cst_5 [1] : vector<8x8xf32> to vector<8xf32>
    %6 = vector.shape_cast %5 : vector<8xf32> to vector<8x1xf32>
    %7 = vector.broadcast %6 : vector<8x1xf32> to vector<8x8xf32>
    %8 = arith.subf %4, %7 : vector<8x8xf32>
    %9 = math.exp %8 : vector<8x8xf32>
    %cst_6 = arith.constant dense<0.000000e+00> : vector<8xf32>
    %10 = vector.multi_reduction <add>, %9, %cst_6 [1] : vector<8x8xf32> to vector<8xf32>
    %11 = vector.shape_cast %10 : vector<8xf32> to vector<8x1xf32>
    %12 = vector.broadcast %11 : vector<8x1xf32> to vector<8x8xf32>
    %13 = arith.divf %9, %12 : vector<8x8xf32>
    %cst_7 = arith.constant dense<0.000000e+00> : vector<2x8xf32>
    %14 = tpu.matmul %1, %3, %cst_7 {dimension_numbers = #tpu.dot_dimension_numbers<[1], [1], [0], [0], [0, 0, 1, 0], [], []>} : vector<2x32xf32>, vector<8x32xf32>, vector<2x8xf32> -> vector<2x8xf32>
    %15 = vector.extract_strided_slice %14 {offsets = [0, 0], sizes = [1, 8], strides = [1, 1]} : vector<2x8xf32> to vector<1x8xf32>
    %16 = vector.extract_strided_slice %13 {offsets = [0, 0], sizes = [4, 8], strides = [1, 1]} : vector<8x8xf32> to vector<4x8xf32>
    %cst_8 = arith.constant dense<0.000000e+00> : vector<1x4xf32>
    %17 = tpu.matmul %15, %16, %cst_8 {dimension_numbers = #tpu.dot_dimension_numbers<[1], [1], [0], [0], [0, 0, 1, 0], [], []>} : vector<1x8xf32>, vector<4x8xf32>, vector<1x4xf32> -> vector<1x4xf32>
    %18 = vector.extract_strided_slice %14 {offsets = [1, 0], sizes = [1, 8], strides = [1, 1]} : vector<2x8xf32> to vector<1x8xf32>
    %19 = vector.extract_strided_slice %13 {offsets = [4, 0], sizes = [4, 8], strides = [1, 1]} : vector<8x8xf32> to vector<4x8xf32>
    %cst_9 = arith.constant dense<0.000000e+00> : vector<1x4xf32>
    %20 = tpu.matmul %18, %19, %cst_9 {dimension_numbers = #tpu.dot_dimension_numbers<[1], [1], [0], [0], [0, 0, 1, 0], [], []>} : vector<1x8xf32>, vector<4x8xf32>, vector<1x4xf32> -> vector<1x4xf32>
    %21 = arith.addf %17, %20 : vector<1x4xf32>
    %c8_10 = arith.constant 8 : index
    %c0_11 = arith.constant 0 : index
    %22 = vector.load %arg0[%c8_10, %c0_11] : memref<16x32xf32, #tpu.memory_space<vmem>>, vector<8x32xf32>
    %cst_12 = arith.constant dense<0.000000e+00> : vector<8x8xf32>
    %23 = tpu.matmul %0, %22, %cst_12 {dimension_numbers = #tpu.dot_dimension_numbers<[1], [1], [0], [0], [0, 0, 1, 0], [], []>} : vector<8x32xf32>, vector<8x32xf32>, vector<8x8xf32> -> vector<8x8xf32>
    %cst_13 = arith.constant dense<0xFF800000> : vector<8xf32>
    %24 = vector.multi_reduction <maximumf>, %23, %cst_13 [1] : vector<8x8xf32> to vector<8xf32>
    %25 = vector.shape_cast %24 : vector<8xf32> to vector<8x1xf32>
    %26 = vector.broadcast %25 : vector<8x1xf32> to vector<8x8xf32>
    %27 = arith.subf %23, %26 : vector<8x8xf32>
    %28 = math.exp %27 : vector<8x8xf32>
    %cst_14 = arith.constant dense<0.000000e+00> : vector<8xf32>
    %29 = vector.multi_reduction <add>, %28, %cst_14 [1] : vector<8x8xf32> to vector<8xf32>
    %30 = vector.shape_cast %29 : vector<8xf32> to vector<8x1xf32>
    %31 = vector.broadcast %30 : vector<8x1xf32> to vector<8x8xf32>
    %32 = arith.divf %28, %31 : vector<8x8xf32>
    %cst_15 = arith.constant dense<0.000000e+00> : vector<2x8xf32>
    %33 = tpu.matmul %1, %22, %cst_15 {dimension_numbers = #tpu.dot_dimension_numbers<[1], [1], [0], [0], [0, 0, 1, 0], [], []>} : vector<2x32xf32>, vector<8x32xf32>, vector<2x8xf32> -> vector<2x8xf32>
    %34 = vector.extract_strided_slice %33 {offsets = [0, 0], sizes = [1, 8], strides = [1, 1]} : vector<2x8xf32> to vector<1x8xf32>
    %35 = vector.extract_strided_slice %32 {offsets = [0, 0], sizes = [4, 8], strides = [1, 1]} : vector<8x8xf32> to vector<4x8xf32>
    %cst_16 = arith.constant dense<0.000000e+00> : vector<1x4xf32>
    %36 = tpu.matmul %34, %35, %cst_16 {dimension_numbers = #tpu.dot_dimension_numbers<[1], [1], [0], [0], [0, 0, 1, 0], [], []>} : vector<1x8xf32>, vector<4x8xf32>, vector<1x4xf32> -> vector<1x4xf32>
    %37 = vector.extract_strided_slice %33 {offsets = [1, 0], sizes = [1, 8], strides = [1, 1]} : vector<2x8xf32> to vector<1x8xf32>
    %38 = vector.extract_strided_slice %32 {offsets = [4, 0], sizes = [4, 8], strides = [1, 1]} : vector<8x8xf32> to vector<4x8xf32>
    %cst_17 = arith.constant dense<0.000000e+00> : vector<1x4xf32>
    %39 = tpu.matmul %37, %38, %cst_17 {dimension_numbers = #tpu.dot_dimension_numbers<[1], [1], [0], [0], [0, 0, 1, 0], [], []>} : vector<1x8xf32>, vector<4x8xf32>, vector<1x4xf32> -> vector<1x4xf32>
    %40 = arith.addf %36, %39 : vector<1x4xf32>
    %41 = tpu.concatenate %21, %40 in 0 : vector<1x4xf32>, vector<1x4xf32> -> vector<2x4xf32>
    %42 = vector.broadcast %2 : vector<1x4xf32> to vector<2x4xf32>
    %43 = arith.addf %41, %42 : vector<2x4xf32>
    %c0_18 = arith.constant 0 : index
    %c0_19 = arith.constant 0 : index
    %44 = vector.load %arg2[%c0_18, %c0_19] : memref<2x4xf32, #tpu.memory_space<vmem>>, vector<2x4xf32>
    tpu.vector_store %arg2[%c0_18, %c0_19], %43 {strides = array<i32>} : memref<2x4xf32, #tpu.memory_space<vmem>>, vector<2x4xf32>,
    return
  }
}

</mosaic_0001>

<llo_original>
// kernel: tpu_custom_call.1
$region0: #{tpu_custom_call.1}
  #allocation0 [shape = 'u32[]', space=smem, size = 0x4, offset = 0x4, fixed_abs, tag = 'smem constant byte address 0x4 - core index']
  #allocation1 [shape = 'u32[72,128]{1,0:T(1,128)}', space=vmem, size = 0x9000, scoped, tag = 'internal scratch']
  %s0 = inlined_call_operand.hbm [shape: f32[16,32], index: 0, kind: input, shape index: {}]
  %s1 = inlined_call_operand.hbm [shape: f32[16,32], index: 1, kind: input, shape index: {}]
  %s2 = inlined_call_operand.hbm [shape: f32[2,4], index: 2, kind: output, shape index: {}]
  %s3 = sld [smem:[#allocation0]]
  $region26: #{tpu_custom_call.1} parent=0
    _
  %s5 = ssub.s32 1, %s3
  %s6 = scalar_select 0, %s5, %s3
  $region1: #{tpu_custom_call.1} parent=0
    #allocation2 [shape = 'u8[8192]{0}', space=vmem, size = 0x2000, scoped, tag = 'input window, operand 0, single buffered']
    #allocation3 [shape = 's32[1]{0}', space=sflag, size = 0x4, scoped, tag = 'scoped memory for tpu_custom_call.1']
    #allocation4 [shape = 's32[1]{0}', space=sflag, size = 0x4, scoped, tag = 'scoped memory for tpu_custom_call.1']
    #allocation5 [shape = 'u8[8192]{0}', space=vmem, size = 0x2000, scoped, tag = 'input window, operand 1, single buffered']
    #allocation6 [shape = 's32[1]{0}', space=sflag, size = 0x4, scoped, tag = 'scoped memory for tpu_custom_call.1']
    #allocation7 [shape = 'u8[1024]{0}', space=vmem, size = 0x400, scoped, tag = 'output window, operand 0, single buffered']
    %7 = vsyncpa [#allocation3], 0
    %8 = vsyncpa [#allocation6], 0
    %9 = vsyncpa [#allocation4], 0
    // Predicated region
    $region2: #{tpu_custom_call.1} parent=1 // pred_check
      _
    $region3: #{tpu_custom_call.1} parent=1 // pred_check_branch
      %11 = sbr.rel (0) target = $region5
    $region4: #{tpu_custom_call.1} parent=1 // pred_region
      %13 = vsyncadd [#allocation3], 0
      %s14 = sshll.u32 %s0, 4
      %s15 = int_to_ptr.hbm [resolvable:$true] %s14
      %s16 = sshll.u32 [#allocation2], 4
      %s17 = int_to_ptr.vmem [resolvable:$true] %s16
      %22 = dma.hbm_to_vmem [thread:$0]  %s15, 256, %s17, [#allocation3], 128, 128, 8
    $region5: #{tpu_custom_call.1} parent=1 // pred_fallthru
      _
    // Predicated region
    $region6: #{tpu_custom_call.1} parent=1 // pred_check
      _
    $region7: #{tpu_custom_call.1} parent=1 // pred_check_branch
      %24 = sbr.rel (0) target = $region9
    $region8: #{tpu_custom_call.1} parent=1 // pred_region
      %26 = vsyncadd [#allocation6], 0
      %s27 = sshll.u32 %s1, 4
      %s28 = int_to_ptr.hbm [resolvable:$true] %s27
      %s29 = sshll.u32 [#allocation5], 4
      %s30 = int_to_ptr.vmem [resolvable:$true] %s29
      %35 = dma.hbm_to_vmem [thread:$0]  %s28, 256, %s30, [#allocation6], 128, 128, 8
    $region9: #{tpu_custom_call.1} parent=1 // pred_fallthru
      _
    // Predicated region
    $region10: #{tpu_custom_call.1} parent=1 // pred_check
      _
    $region11: #{tpu_custom_call.1} parent=1 // pred_check_branch
      %37 = sbr.rel (0) target = $region13
    $region12: #{tpu_custom_call.1} parent=1 // pred_region
      %39 = dma.done [#allocation3], 256
    $region13: #{tpu_custom_call.1} parent=1 // pred_fallthru
      _
    // Predicated region
    $region14: #{tpu_custom_call.1} parent=1 // pred_check
      _
    $region15: #{tpu_custom_call.1} parent=1 // pred_check_branch
      %41 = sbr.rel (0) target = $region17
    $region16: #{tpu_custom_call.1} parent=1 // pred_region
      %43 = dma.done [#allocation6], 256
    $region17: #{tpu_custom_call.1} parent=1 // pred_fallthru
      _
    %v44 = vld [vmem:[#allocation5] sm:$0xff]
    %v45 = vld [vmem:[#allocation5 + $0x8] sm:$0x3]
    %v46 = vld [vmem:[#allocation5 + $0xa] sm:$0x1]
    %v47 = vld [vmem:[#allocation2] sm:$0xff]
    %vm48 = vcmask 261120
    %v50 = vsel %vm48, %v44, 0
    %v53 = vsel %vm48, %v47, 0
    %55 = vmatpush.xpose.msra.mxu0 0.0
    %56 = vmatpush.xpose.msra.mxu0 0.0
    %57 = vmatpush.xpose.msra.mxu0 0.0
    %58 = vmatpush.xpose.msra.mxu0 0.0
    %59 = vmatpush.xpose.msra.mxu0 0.0
    %60 = vmatpush.xpose.msra.mxu0 0.0
    %61 = vmatpush.xpose.msra.mxu0 0.0
    %62 = vmatpush.xpose.msra.mxu0 0.0
    %63 = vmatpush.xpose.msra.mxu0 0.0
    %64 = vmatpush.xpose.msra.mxu0 0.0
    %65 = vmatpush.xpose.msra.mxu0 0.0
    %66 = vmatpush.xpose.msra.mxu0 0.0
    %67 = vmatpush.xpose.msra.mxu0 0.0
    %68 = vmatpush.xpose.msra.mxu0 0.0
    %69 = vmatpush.xpose.msra.mxu0 0.0
    %70 = vmatpush.xpose.msra.mxu0 %v53
    %71 = vmatmul.f32.gmra.mxu0 %v50
    %v72 = vpop.f32.mrf.mxu0
    %v73 = vadd.f32 0.0, %v72
    %74 = vdwg.mxu0
    %vm75 = vcmask 64512
    %v76 = vsel %vm75, %v73, -inf
    %77 = vmax.xlane.f32.xlu0 %v76
    %v78 = vpop.xlane.xlu0 %77
    %v79 = vsub.f32 %v73, %v78
    %v80 = vmul.f32 %v79, 1.442695
    %v81 = vpow.pop %v80
    %v82 = vsel %vm75, %v81, 0.0
    %83 = vadd.xlane.f32.xlu0 %v82
    %v84 = vpop.xlane.xlu0 %83
    %v85 = vrcp.pop %v84
    %v86 = vmul.f32 %v84, %v85
    %v87 = vsub.f32 1.0, %v86
    %v88 = vmul.f32 %v85, %v87
    %v89 = vadd.f32 %v85, %v88
    %vm90 = vweird.f32 %v84
    %vm91 = vweird.f32 %v85
    %vm92 = vmor %vm90, %vm91
    %v93 = vsel %vm92, %v85, %v89
    %v94 = vand.u32 2147483647, %v84
    %vm95 = vcmp.eq.f32.partialorder %v94, 8.507059e+37
    %v96 = vand.u32 %v84, 2147483648
    %v97 = vor.u32 1.1754944e-38, %v96
    %v98 = vsel %vm95, %v97, %v93
    %v99 = vmul.f32 %v81, %v98
    %v101 = vsel %vm48, %v45, 0
    %103 = vmatpush.xpose.msra.mxu0 0.0
    %104 = vmatpush.xpose.msra.mxu0 0.0
    %105 = vmatpush.xpose.msra.mxu0 0.0
    %106 = vmatpush.xpose.msra.mxu0 0.0
    %107 = vmatpush.xpose.msra.mxu0 0.0
    %108 = vmatpush.xpose.msra.mxu0 0.0
    %109 = vmatpush.xpose.msra.mxu0 0.0
    %110 = vmatpush.xpose.msra.mxu0 0.0
    %111 = vmatpush.xpose.msra.mxu0 0.0
    %112 = vmatpush.xpose.msra.mxu0 0.0
    %113 = vmatpush.xpose.msra.mxu0 0.0
    %114 = vmatpush.xpose.msra.mxu0 0.0
    %115 = vmatpush.xpose.msra.mxu0 0.0
    %116 = vmatpush.xpose.msra.mxu0 0.0
    %117 = vmatpush.xpose.msra.mxu0 0.0
    %118 = vmatpush.xpose.msra.mxu0 %v53
    %119 = vmatmul.f32.gmra.mxu0 %v101
    %v120 = vpop.f32.mrf.mxu0
    %v121 = vadd.f32 0.0, %v120
    %122 = vdwg.mxu0
    %v124 = vrot.slane %v121, 1
    %v126 = vrot.slane %v99, 4
    %v127 = vsel %vm75, %v124, 0
    %v129 = vsel %vm75, %v126, 0
    %131 = vmatpush.xpose.msra.mxu0 0.0
    %132 = vmatpush.xpose.msra.mxu0 0.0
    %133 = vmatpush.xpose.msra.mxu0 0.0
    %134 = vmatpush.xpose.msra.mxu0 0.0
    %135 = vmatpush.xpose.msra.mxu0 0.0
    %136 = vmatpush.xpose.msra.mxu0 0.0
    %137 = vmatpush.xpose.msra.mxu0 0.0
    %138 = vmatpush.xpose.msra.mxu0 0.0
    %139 = vmatpush.xpose.msra.mxu0 0.0
    %140 = vmatpush.xpose.msra.mxu0 0.0
    %141 = vmatpush.xpose.msra.mxu0 0.0
    %142 = vmatpush.xpose.msra.mxu0 0.0
    %143 = vmatpush.xpose.msra.mxu0 0.0
    %144 = vmatpush.xpose.msra.mxu0 0.0
    %145 = vmatpush.xpose.msra.mxu0 0.0
    %146 = vmatpush.xpose.msra.mxu0 %v129
    %147 = vmatmul.f32.gmra.mxu0 %v127
    %v148 = vpop.f32.mrf.mxu0
    %v149 = vadd.f32 0.0, %v148
    %150 = vdwg.mxu0
    %v151 = vsel %vm75, %v121, 0
    %v153 = vsel %vm75, %v99, 0
    %155 = vmatpush.xpose.msra.mxu0 0.0
    %156 = vmatpush.xpose.msra.mxu0 0.0
    %157 = vmatpush.xpose.msra.mxu0 0.0
    %158 = vmatpush.xpose.msra.mxu0 0.0
    %159 = vmatpush.xpose.msra.mxu0 0.0
    %160 = vmatpush.xpose.msra.mxu0 0.0
    %161 = vmatpush.xpose.msra.mxu0 0.0
    %162 = vmatpush.xpose.msra.mxu0 0.0
    %163 = vmatpush.xpose.msra.mxu0 0.0
    %164 = vmatpush.xpose.msra.mxu0 0.0
    %165 = vmatpush.xpose.msra.mxu0 0.0
    %166 = vmatpush.xpose.msra.mxu0 0.0
    %167 = vmatpush.xpose.msra.mxu0 0.0
    %168 = vmatpush.xpose.msra.mxu0 0.0
    %169 = vmatpush.xpose.msra.mxu0 0.0
    %170 = vmatpush.xpose.msra.mxu0 %v153
    %171 = vmatmul.f32.gmra.mxu0 %v151
    %v172 = vpop.f32.mrf.mxu0
    %v173 = vadd.f32 %v149, %v172
    %174 = vdwg.mxu0
    %v175 = vld [vmem:[#allocation2 + $0x8] sm:$0xff]
    %v177 = vsel %vm48, %v175, 0
    %179 = vmatpush.xpose.msra.mxu0 0.0
    %180 = vmatpush.xpose.msra.mxu0 0.0
    %181 = vmatpush.xpose.msra.mxu0 0.0
    %182 = vmatpush.xpose.msra.mxu0 0.0
    %183 = vmatpush.xpose.msra.mxu0 0.0
    %184 = vmatpush.xpose.msra.mxu0 0.0
    %185 = vmatpush.xpose.msra.mxu0 0.0
    %186 = vmatpush.xpose.msra.mxu0 0.0
    %187 = vmatpush.xpose.msra.mxu0 0.0
    %188 = vmatpush.xpose.msra.mxu0 0.0
    %189 = vmatpush.xpose.msra.mxu0 0.0
    %190 = vmatpush.xpose.msra.mxu0 0.0
    %191 = vmatpush.xpose.msra.mxu0 0.0
    %192 = vmatpush.xpose.msra.mxu0 0.0
    %193 = vmatpush.xpose.msra.mxu0 0.0
    %194 = vmatpush.xpose.msra.mxu0 %v177
    %195 = vmatmul.f32.gmra.mxu0 %v50
    %v196 = vpop.f32.mrf.mxu0
    %v197 = vadd.f32 0.0, %v196
    %198 = vdwg.mxu0
    %v199 = vsel %vm75, %v197, -inf
    %200 = vmax.xlane.f32.xlu0 %v199
    %v201 = vpop.xlane.xlu0 %200
    %v202 = vsub.f32 %v197, %v201
    %v203 = vmul.f32 %v202, 1.442695
    %v204 = vpow.pop %v203
    %v205 = vsel %vm75, %v204, 0.0
    %206 = vadd.xlane.f32.xlu0 %v205
    %v207 = vpop.xlane.xlu0 %206
    %v208 = vrcp.pop %v207
    %v209 = vmul.f32 %v207, %v208
    %v210 = vsub.f32 1.0, %v209
    %v211 = vmul.f32 %v208, %v210
    %v212 = vadd.f32 %v208, %v211
    %vm213 = vweird.f32 %v207
    %vm214 = vweird.f32 %v208
    %vm215 = vmor %vm213, %vm214
    %v216 = vsel %vm215, %v208, %v212
    %v217 = vand.u32 2147483647, %v207
    %vm218 = vcmp.eq.f32.partialorder %v217, 8.507059e+37
    %v219 = vand.u32 %v207, 2147483648
    %v220 = vor.u32 1.1754944e-38, %v219
    %v221 = vsel %vm218, %v220, %v216
    %v222 = vmul.f32 %v204, %v221
    %223 = vmatpush.xpose.msra.mxu0 0.0
    %224 = vmatpush.xpose.msra.mxu0 0.0
    %225 = vmatpush.xpose.msra.mxu0 0.0
    %226 = vmatpush.xpose.msra.mxu0 0.0
    %227 = vmatpush.xpose.msra.mxu0 0.0
    %228 = vmatpush.xpose.msra.mxu0 0.0
    %229 = vmatpush.xpose.msra.mxu0 0.0
    %230 = vmatpush.xpose.msra.mxu0 0.0
    %231 = vmatpush.xpose.msra.mxu0 0.0
    %232 = vmatpush.xpose.msra.mxu0 0.0
    %233 = vmatpush.xpose.msra.mxu0 0.0
    %234 = vmatpush.xpose.msra.mxu0 0.0
    %235 = vmatpush.xpose.msra.mxu0 0.0
    %236 = vmatpush.xpose.msra.mxu0 0.0
    %237 = vmatpush.xpose.msra.mxu0 0.0
    %238 = vmatpush.xpose.msra.mxu0 %v177
    %239 = vmatmul.f32.gmra.mxu0 %v101
    %v240 = vpop.f32.mrf.mxu0
    %v241 = vadd.f32 0.0, %v240
    %242 = vdwg.mxu0
    %v244 = vrot.slane %v241, 1
    %v246 = vrot.slane %v222, 4
    %v247 = vsel %vm75, %v244, 0
    %v249 = vsel %vm75, %v246, 0
    %251 = vmatpush.xpose.msra.mxu0 0.0
    %252 = vmatpush.xpose.msra.mxu0 0.0
    %253 = vmatpush.xpose.msra.mxu0 0.0
    %254 = vmatpush.xpose.msra.mxu0 0.0
    %255 = vmatpush.xpose.msra.mxu0 0.0
    %256 = vmatpush.xpose.msra.mxu0 0.0
    %257 = vmatpush.xpose.msra.mxu0 0.0
    %258 = vmatpush.xpose.msra.mxu0 0.0
    %259 = vmatpush.xpose.msra.mxu0 0.0
    %260 = vmatpush.xpose.msra.mxu0 0.0
    %261 = vmatpush.xpose.msra.mxu0 0.0
    %262 = vmatpush.xpose.msra.mxu0 0.0
    %263 = vmatpush.xpose.msra.mxu0 0.0
    %264 = vmatpush.xpose.msra.mxu0 0.0
    %265 = vmatpush.xpose.msra.mxu0 0.0
    %266 = vmatpush.xpose.msra.mxu0 %v249
    %267 = vmatmul.f32.gmra.mxu0 %v247
    %v268 = vpop.f32.mrf.mxu0
    %v269 = vadd.f32 0.0, %v268
    %270 = vdwg.mxu0
    %v271 = vsel %vm75, %v241, 0
    %v273 = vsel %vm75, %v222, 0
    %275 = vmatpush.xpose.msra.mxu0 0.0
    %276 = vmatpush.xpose.msra.mxu0 0.0
    %277 = vmatpush.xpose.msra.mxu0 0.0
    %278 = vmatpush.xpose.msra.mxu0 0.0
    %279 = vmatpush.xpose.msra.mxu0 0.0
    %280 = vmatpush.xpose.msra.mxu0 0.0
    %281 = vmatpush.xpose.msra.mxu0 0.0
    %282 = vmatpush.xpose.msra.mxu0 0.0
    %283 = vmatpush.xpose.msra.mxu0 0.0
    %284 = vmatpush.xpose.msra.mxu0 0.0
    %285 = vmatpush.xpose.msra.mxu0 0.0
    %286 = vmatpush.xpose.msra.mxu0 0.0
    %287 = vmatpush.xpose.msra.mxu0 0.0
    %288 = vmatpush.xpose.msra.mxu0 0.0
    %289 = vmatpush.xpose.msra.mxu0 0.0
    %290 = vmatpush.xpose.msra.mxu0 %v273
    %291 = vmatmul.f32.gmra.mxu0 %v271
    %v292 = vpop.f32.mrf.mxu0
    %v293 = vadd.f32 %v269, %v292
    %294 = vdwg.mxu0
    %v296 = vrot.slane %v293, 7
    %vm298 = vcmask 1040384
    %v299 = vsel %vm298, %v173, %v296
    %v300 = vperm.slane %v46, 0
    %v301 = vadd.f32 %v299, %v300
    %vm302 = vcmask 25600
    %303 = vst.msk [vmem:[#allocation7] sm:$0x3] %vm302, %v301
    // Predicated region
    $region18: #{tpu_custom_call.1} parent=1 // pred_check
      _
    $region19: #{tpu_custom_call.1} parent=1 // pred_check_branch
      %305 = sbr.rel (0) target = $region21
    $region20: #{tpu_custom_call.1} parent=1 // pred_region
      %307 = vsyncadd [#allocation4], 0
      %s309 = sshll.u32 [#allocation7], 4
      %s310 = int_to_ptr.vmem [resolvable:$true] %s309
      %s311 = sshll.u32 %s2, 4
      %s312 = int_to_ptr.hbm [resolvable:$true] %s311
      %314 = dma.vmem_to_hbm [thread:$0]  %s310, 32, %s312, [#allocation4]
    $region21: #{tpu_custom_call.1} parent=1 // pred_fallthru
      _
    // Predicated region
    $region22: #{tpu_custom_call.1} parent=1 // pred_check
      _
    $region23: #{tpu_custom_call.1} parent=1 // pred_check_branch
      %316 = sbr.rel (0) target = $region25
    $region24: #{tpu_custom_call.1} parent=1 // pred_region
      %318 = dma.done [#allocation4], 32
    $region25: #{tpu_custom_call.1} parent=1 // pred_fallthru
      _
    %319 = vsyncpa [#allocation3], 1
    %320 = vsyncpa [#allocation6], 1
    %321 = vsyncpa [#allocation4], 1

</llo_original>
